<compile_context>
chip_gen: v7x
topology: tpu7x:2x2x1
jax: 0.10.0
libtpu: 0.0.40
codegen_flags: <defaults>
</compile_context>

<pallas_src>
import jax
import jax.numpy as jnp
from jax.experimental import pallas as pl
from jax.experimental.pallas import tpu as pltpu

# ---- model sizes (opts) ----------------------------------------------------
N_VOCAB = 16        # opts.n_vocab
HIDDEN = 32         # opts.rnn_hidden_size
N_CONCEPTS = 12     # opts.n_concepts (4 sectors + 4 segments + 4 colors)
N_STEPS = 3
CONCEPT_ORDER = ("sector", "segment", "color")

LANE = 128
COMB = HIDDEN + N_CONCEPTS           # 44 = width of the fused [hidden | out] carrier

# ---- parameter-slab row layout (all pieces lane-padded to 128) --------------
WX_OFF = 0                            # (N_VOCAB, LANE): [Wih_x | Wio_x] in cols 0:44
WH_OFF = WX_OFF + N_VOCAB             # 16,  (LANE, LANE): rows 0:32 = [Wih_h | Wio_h]
WO_OFF = WH_OFF + LANE                # 144, (LANE, LANE): rows 0:44 = [Woo_h ; Woo_o], cols 0:12
MISC_OFF = WO_OFF + LANE              # 272, (8, LANE): row0=b_pre, row1=b_oo, rows 2:5=mask
SLAB_ROWS = MISC_OFF + 8              # 280
OUT_ROWS = 16                         # single lane-dense output slab


def lnet_kernel(msg_ref, h0_ref, slab_ref, out_ref):
    """3-step recurrent decode, fully fused.

    msg_ref : (3, N_VOCAB)        one row per step
    h0_ref  : (1, LANE)           initial carrier (hidden in cols 0:HIDDEN, rest 0)
    slab_ref: (SLAB_ROWS, LANE)   packed fused weights / biases / mask
    out_ref : (OUT_ROWS, LANE)    rows 0:3 digits, 3:6 probs, 6:9 entropy, 9 final carrier
    """
    wx = slab_ref[pl.ds(WX_OFF, N_VOCAB), :]       # (16, 128)
    wh = slab_ref[pl.ds(WH_OFF, LANE), :]          # (128, 128)
    wo = slab_ref[pl.ds(WO_OFF, LANE), :]          # (128, 128)
    misc = slab_ref[pl.ds(MISC_OFF, 8), :]         # (8, 128)
    b_pre = misc[0:1, :]                           # (1, 128)
    b_oo = misc[1:2, :]                            # (1, 128)
    keep = misc[2:2 + N_STEPS, :]                  # (3, 128) keep-mask (1=keep)

    # Hoisted input-side matmul: both i2h and i2o x-contributions for all 3 steps.
    x_pre = jnp.dot(msg_ref[...], wx, preferred_element_type=jnp.float32) + b_pre  # (3, 128)

    # Serial recurrence: one (1,128)@(128,128) matmul per step.
    z = h0_ref[...]                                # (1, 128)
    zs = []
    for i in range(N_STEPS):                       # unrolled (hidden-state carry)
        z = x_pre[i:i + 1, :] + jnp.dot(z, wh, preferred_element_type=jnp.float32)
        zs.append(z)
    z_all = jnp.concatenate(zs, axis=0)            # (3, 128): [hidden_i | pre-o2o out_i | 0]

    # Batched o2o for all 3 steps, then exact -10000 concept masking.
    out = jnp.dot(z_all, wo, preferred_element_type=jnp.float32) + b_oo            # (3, 128)
    out = jnp.where(keep > 0.5, out, jnp.float32(-10000.0))                        # digits

    # Softmax over the concept lanes (masked / padding lanes underflow to prob 0,
    # identical to the reference float32 behaviour).
    shifted = out - jnp.max(out, axis=-1, keepdims=True)
    e = jnp.exp(shifted)
    s = jnp.sum(e, axis=-1, keepdims=True)
    inv_s = 1.0 / s
    p = e * inv_s                                                                   # probs
    # Categorical entropy from the softmax intermediates: H = log s - sum(e*shifted)/s
    ent = jnp.log(s) - jnp.sum(e * shifted, axis=-1, keepdims=True) * inv_s         # (3, 1)

    out_ref[...] = jnp.concatenate([
        out,                                        # rows 0:3  digits
        p,                                          # rows 3:6  probs
        jnp.broadcast_to(ent, (N_STEPS, LANE)),     # rows 6:9  per-step entropy
        z,                                          # row  9    final carrier (hidden in cols 0:HIDDEN)
        jnp.zeros((OUT_ROWS - 3 * N_STEPS - 1, LANE), jnp.float32),
    ], axis=0)


@jax.jit
def lnet_core(msg, h0_pad, slab):
    """Single gridless pallas_call: 3 inputs, 1 lane-dense output slab."""
    vmem = pl.BlockSpec(memory_space=pltpu.MemorySpace.VMEM)
    return pl.pallas_call(
        lnet_kernel,
        out_shape=jax.ShapeDtypeStruct((OUT_ROWS, LANE), jnp.float32),
        in_specs=[vmem, vmem, vmem],
        out_specs=vmem,
    )(msg, h0_pad, slab)


# ---- parameter construction / packing ---------------------------------------
def make_params(key):
    """Deterministic nn.Linear-style init (uniform +-1/sqrt(fan_in)).
    Weights stored (in, out) == PyTorch weight.T, pre-split at the concat seam."""
    ks = jax.random.split(key, 3)

    def lin(k, fan_in, fan_out):
        kw, kb = jax.random.split(k)
        bound = 1.0 / jnp.sqrt(fan_in)
        w = jax.random.uniform(kw, (fan_in, fan_out), jnp.float32, -bound, bound)
        b = jax.random.uniform(kb, (1, fan_out), jnp.float32, -bound, bound)
        return w, b

    w_i2h, b_i2h = lin(ks[0], N_VOCAB + HIDDEN, HIDDEN)
    w_i2o, b_i2o = lin(ks[1], N_VOCAB + HIDDEN, N_CONCEPTS)
    w_o2o, b_o2o = lin(ks[2], HIDDEN + N_CONCEPTS, N_CONCEPTS)
    return {
        "wih_x": w_i2h[:N_VOCAB], "wih_h": w_i2h[N_VOCAB:], "bih": b_i2h,
        "wio_x": w_i2o[:N_VOCAB], "wio_h": w_i2o[N_VOCAB:], "bio": b_i2o,
        "woo_h": w_o2o[:HIDDEN],  "woo_o": w_o2o[HIDDEN:],  "boo": b_o2o,
    }


def make_mask(concept_order):
    """(3, LANE) keep-mask; masked / padding lanes get logits forced to -10000."""
    idx = jnp.arange(LANE)
    valid = idx < N_CONCEPTS
    rows = []
    for c in concept_order:
        if c == "sector":
            keep = idx < 4
        elif c == "segment":
            keep = (idx >= 4) & (idx < 8)
        elif c == "color":
            keep = idx >= 8
        else:
            keep = jnp.ones((LANE,), dtype=bool)
        rows.append((keep & valid).astype(jnp.float32))
    return jnp.stack(rows)


def pack_slab(p, concept_order):
    """Fuse + pack all weights/biases/mask into one (SLAB_ROWS, LANE) f32 buffer.
    Done once at param init; the kernel then needs only 3 input operands."""
    slab = jnp.zeros((SLAB_ROWS, LANE), jnp.float32)
    wx = jnp.concatenate([p["wih_x"], p["wio_x"]], axis=1)      # (V, 44)
    wh = jnp.concatenate([p["wih_h"], p["wio_h"]], axis=1)      # (H, 44)
    wo = jnp.concatenate([p["woo_h"], p["woo_o"]], axis=0)      # (44, C)
    b_pre = jnp.concatenate([p["bih"], p["bio"]], axis=1)       # (1, 44)
    slab = slab.at[WX_OFF:WX_OFF + N_VOCAB, :COMB].set(wx)
    slab = slab.at[WH_OFF:WH_OFF + HIDDEN, :COMB].set(wh)       # rows 32:128 stay 0
    slab = slab.at[WO_OFF:WO_OFF + COMB, :N_CONCEPTS].set(wo)   # rows 44:128 stay 0
    slab = slab.at[MISC_OFF, :COMB].set(b_pre[0])
    slab = slab.at[MISC_OFF + 1, :N_CONCEPTS].set(p["boo"][0])
    slab = slab.at[MISC_OFF + 2:MISC_OFF + 2 + N_STEPS, :].set(make_mask(concept_order))
    return slab


# ---- full LNet.forward semantics ---------------------------------------------
def lnet_forward(msg, hidden, slab, sample_key):
    """Returns (pred_concepts, log_probs, digits, log_probs_i, entropy) like LNet.forward."""
    h0 = jnp.zeros((1, LANE), jnp.float32).at[0, :HIDDEN].set(hidden.astype(jnp.float32))
    raw = lnet_core(msg.astype(jnp.float32), h0, slab)

    digits = raw[0:N_STEPS, :N_CONCEPTS]               # (3, C) masked logits
    probs = raw[N_STEPS:2 * N_STEPS, :N_CONCEPTS]      # (3, C)
    entropy_steps = raw[2 * N_STEPS:3 * N_STEPS, 0]    # (3,)
    # final hidden is available at raw[9, :HIDDEN] (not returned by forward)

    # TODO(synk): the reference's in-loop host print of probs is omitted.
    # OneHotCategorical sampling + log-prob bookkeeping (stochastic glue, not in kernel).
    keys = jax.random.split(sample_key, N_STEPS)
    pred_concepts = []
    log_probs_i = []
    log_probs = jnp.float32(0.0)
    for i in range(N_STEPS):
        samp = jax.random.categorical(keys[i], digits[i])       # logits == masked digits
        predict = jax.nn.one_hot(samp, N_CONCEPTS, dtype=jnp.float32)
        lp = jnp.log(jnp.sum(predict * probs[i], axis=0))
        log_probs = log_probs + lp
        log_probs_i.append(lp)
        pred_concepts.append(predict)
    pred_concepts = jnp.stack(pred_concepts)
    entropy = entropy_steps[N_STEPS - 1]                        # last step (as in reference)
    return pred_concepts, log_probs, digits, log_probs_i, entropy


if __name__ == "__main__":
    root = jax.random.PRNGKey(0)
    k_param, k_msg, k_sample = jax.random.split(root, 3)

    params = make_params(k_param)
    slab = pack_slab(params, CONCEPT_ORDER)
    msg = jax.random.uniform(k_msg, (N_STEPS, N_VOCAB), jnp.float32)   # msg[i] per step
    hidden = jnp.zeros((HIDDEN,), jnp.float32)                         # initHidden()

    pred_concepts, log_probs, digits, log_probs_i, entropy = lnet_forward(
        msg, hidden, slab, k_sample)

    jax.block_until_ready((pred_concepts, log_probs, digits, entropy))
    assert pred_concepts.shape == (N_STEPS, N_CONCEPTS)
    assert digits.shape == (N_STEPS, N_CONCEPTS)
    assert log_probs.shape == ()
    print("KERNEL_OK")
</pallas_src>

<mosaic_0001>
module attributes {stable_mosaic.version = 11 : i64} {
  func.func @lnet_kernel(%arg0: memref<3x16xf32, #tpu.memory_space<vmem>>, %arg1: memref<1x128xf32, #tpu.memory_space<vmem>>, %arg2: memref<280x128xf32, #tpu.memory_space<vmem>>, %arg3: memref<16x128xf32, #tpu.memory_space<vmem>>) attributes {dimension_semantics = [], scalar_prefetch = 0 : i64, scratch_operands = 0 : i64, tpu.core_type = #tpu.core_type<tc>} {
    %c0 = arith.constant 0 : index
    %c0_0 = arith.constant 0 : index
    %0 = vector.load %arg2[%c0, %c0_0] : memref<280x128xf32, #tpu.memory_space<vmem>>, vector<16x128xf32>
    %c16 = arith.constant 16 : index
    %c0_1 = arith.constant 0 : index
    %1 = vector.load %arg2[%c16, %c0_1] : memref<280x128xf32, #tpu.memory_space<vmem>>, vector<128x128xf32>
    %c144 = arith.constant 144 : index
    %c0_2 = arith.constant 0 : index
    %2 = vector.load %arg2[%c144, %c0_2] : memref<280x128xf32, #tpu.memory_space<vmem>>, vector<128x128xf32>
    %c272 = arith.constant 272 : index
    %c0_3 = arith.constant 0 : index
    %3 = vector.load %arg2[%c272, %c0_3] : memref<280x128xf32, #tpu.memory_space<vmem>>, vector<8x128xf32>
    %4 = vector.extract_strided_slice %3 {offsets = [0, 0], sizes = [1, 128], strides = [1, 1]} : vector<8x128xf32> to vector<1x128xf32>
    %5 = vector.extract_strided_slice %3 {offsets = [1, 0], sizes = [1, 128], strides = [1, 1]} : vector<8x128xf32> to vector<1x128xf32>
    %6 = vector.extract_strided_slice %3 {offsets = [2, 0], sizes = [3, 128], strides = [1, 1]} : vector<8x128xf32> to vector<3x128xf32>
    %c0_4 = arith.constant 0 : index
    %c0_5 = arith.constant 0 : index
    %7 = vector.load %arg0[%c0_4, %c0_5] : memref<3x16xf32, #tpu.memory_space<vmem>>, vector<3x16xf32>
    %cst = arith.constant dense<0.000000e+00> : vector<3x128xf32>
    %8 = tpu.matmul %7, %0, %cst {dimension_numbers = #tpu.dot_dimension_numbers<[1], [0], [0], [1], [0, 0, 1, 1], [], []>} : vector<3x16xf32>, vector<16x128xf32>, vector<3x128xf32> -> vector<3x128xf32>
    %9 = vector.broadcast %4 : vector<1x128xf32> to vector<3x128xf32>
    %10 = arith.addf %8, %9 : vector<3x128xf32>
    %c0_6 = arith.constant 0 : index
    %c0_7 = arith.constant 0 : index
    %11 = vector.load %arg1[%c0_6, %c0_7] : memref<1x128xf32, #tpu.memory_space<vmem>>, vector<1x128xf32>
    %12 = vector.extract_strided_slice %10 {offsets = [0, 0], sizes = [1, 128], strides = [1, 1]} : vector<3x128xf32> to vector<1x128xf32>
    %cst_8 = arith.constant dense<0.000000e+00> : vector<1x128xf32>
    %13 = tpu.matmul %11, %1, %cst_8 {dimension_numbers = #tpu.dot_dimension_numbers<[1], [0], [0], [1], [0, 0, 1, 1], [], []>} : vector<1x128xf32>, vector<128x128xf32>, vector<1x128xf32> -> vector<1x128xf32>
    %14 = arith.addf %12, %13 : vector<1x128xf32>
    %15 = vector.extract_strided_slice %10 {offsets = [1, 0], sizes = [1, 128], strides = [1, 1]} : vector<3x128xf32> to vector<1x128xf32>
    %cst_9 = arith.constant dense<0.000000e+00> : vector<1x128xf32>
    %16 = tpu.matmul %14, %1, %cst_9 {dimension_numbers = #tpu.dot_dimension_numbers<[1], [0], [0], [1], [0, 0, 1, 1], [], []>} : vector<1x128xf32>, vector<128x128xf32>, vector<1x128xf32> -> vector<1x128xf32>
    %17 = arith.addf %15, %16 : vector<1x128xf32>
    %18 = vector.extract_strided_slice %10 {offsets = [2, 0], sizes = [1, 128], strides = [1, 1]} : vector<3x128xf32> to vector<1x128xf32>
    %cst_10 = arith.constant dense<0.000000e+00> : vector<1x128xf32>
    %19 = tpu.matmul %17, %1, %cst_10 {dimension_numbers = #tpu.dot_dimension_numbers<[1], [0], [0], [1], [0, 0, 1, 1], [], []>} : vector<1x128xf32>, vector<128x128xf32>, vector<1x128xf32> -> vector<1x128xf32>
    %20 = arith.addf %18, %19 : vector<1x128xf32>
    %21 = tpu.concatenate %14, %17, %20 in 0 : vector<1x128xf32>, vector<1x128xf32>, vector<1x128xf32> -> vector<3x128xf32>
    %cst_11 = arith.constant dense<0.000000e+00> : vector<3x128xf32>
    %22 = tpu.matmul %21, %2, %cst_11 {dimension_numbers = #tpu.dot_dimension_numbers<[1], [0], [0], [1], [0, 0, 1, 1], [], []>} : vector<3x128xf32>, vector<128x128xf32>, vector<3x128xf32> -> vector<3x128xf32>
    %23 = vector.broadcast %5 : vector<1x128xf32> to vector<3x128xf32>
    %24 = arith.addf %22, %23 : vector<3x128xf32>
    %cst_12 = arith.constant 5.000000e-01 : f32
    %25 = vector.broadcast %cst_12 : f32 to vector<3x128xf32>
    %26 = arith.cmpf ogt, %6, %25 : vector<3x128xf32>
    %cst_13 = arith.constant -1.000000e+04 : f32
    %27 = vector.broadcast %cst_13 : f32 to vector<3x128xf32>
    %28 = arith.select %26, %24, %27 : vector<3x128xi1>, vector<3x128xf32>
    %cst_14 = arith.constant dense<0xFF800000> : vector<3xf32>
    %29 = vector.multi_reduction <maximumf>, %28, %cst_14 [1] : vector<3x128xf32> to vector<3xf32>
    %30 = vector.shape_cast %29 : vector<3xf32> to vector<3x1xf32>
    %31 = vector.broadcast %30 : vector<3x1xf32> to vector<3x128xf32>
    %32 = arith.subf %28, %31 : vector<3x128xf32>
    %33 = math.exp %32 : vector<3x128xf32>
    %cst_15 = arith.constant dense<0.000000e+00> : vector<3xf32>
    %34 = vector.multi_reduction <add>, %33, %cst_15 [1] : vector<3x128xf32> to vector<3xf32>
    %35 = vector.shape_cast %34 : vector<3xf32> to vector<3x1xf32>
    %cst_16 = arith.constant 1.000000e+00 : f32
    %36 = vector.broadcast %cst_16 : f32 to vector<3x1xf32>
    %37 = arith.divf %36, %35 : vector<3x1xf32>
    %38 = vector.broadcast %37 : vector<3x1xf32> to vector<3x128xf32>
    %39 = arith.mulf %33, %38 : vector<3x128xf32>
    %40 = math.log %35 : vector<3x1xf32>
    %41 = arith.mulf %33, %32 : vector<3x128xf32>
    %cst_17 = arith.constant dense<0.000000e+00> : vector<3xf32>
    %42 = vector.multi_reduction <add>, %41, %cst_17 [1] : vector<3x128xf32> to vector<3xf32>
    %43 = vector.shape_cast %42 : vector<3xf32> to vector<3x1xf32>
    %44 = arith.mulf %43, %37 : vector<3x1xf32>
    %45 = arith.subf %40, %44 : vector<3x1xf32>
    %46 = vector.shape_cast %45 : vector<3x1xf32> to vector<3x1xf32>
    %47 = vector.broadcast %46 : vector<3x1xf32> to vector<3x128xf32>
    %cst_18 = arith.constant 0.000000e+00 : f32
    %48 = vector.broadcast %cst_18 : f32 to vector<6x128xf32>
    %49 = tpu.concatenate %28, %39, %47, %20, %48 in 0 : vector<3x128xf32>, vector<3x128xf32>, vector<3x128xf32>, vector<1x128xf32>, vector<6x128xf32> -> vector<16x128xf32>
    %c0_19 = arith.constant 0 : index
    %c0_20 = arith.constant 0 : index
    %50 = vector.load %arg3[%c0_19, %c0_20] : memref<16x128xf32, #tpu.memory_space<vmem>>, vector<16x128xf32>
    tpu.vector_store %arg3[%c0_19, %c0_20], %49 {strides = array<i32>} : memref<16x128xf32, #tpu.memory_space<vmem>>, vector<16x128xf32>,
    return
  }
}

</mosaic_0001>

<llo_original>
// kernel: lnet_core.1
$region0: #{lnet_core.1}
  #allocation0 [shape = 'u32[]', space=smem, size = 0x4, offset = 0x4, fixed_abs, tag = 'smem constant byte address 0x4 - core index']
  #allocation1 [shape = 'u32[144,128]{1,0:T(1,128)}', space=vmem, size = 0x12000, scoped, tag = 'internal scratch']
  %s0 = inlined_call_operand.hbm [shape: f32[3,16], index: 0, kind: input, shape index: {}]
  %s1 = inlined_call_operand.vmem [shape: f32[1,128], index: 1, kind: input, shape index: {}]
  %s2 = inlined_call_operand.hbm [shape: f32[280,128], index: 2, kind: input, shape index: {}]
  %s3 = inlined_call_operand.hbm [shape: f32[16,128], index: 3, kind: output, shape index: {}]
  %s4 = sld [smem:[#allocation0]]
  $region30: #{lnet_core.1} parent=0
    _
  %s6 = ssub.s32 1, %s4
  %s7 = scalar_select 0, %s6, %s4
  $region1: #{lnet_core.1} parent=0
    #allocation2 [shape = 'u8[2048]{0}', space=vmem, size = 0x800, scoped, tag = 'input window, operand 0, single buffered']
    #allocation3 [shape = 's32[1]{0}', space=sflag, size = 0x4, scoped, tag = 'scoped memory for lnet_core.1']
    #allocation4 [shape = 's32[1]{0}', space=sflag, size = 0x4, scoped, tag = 'scoped memory for lnet_core.1']
    #allocation5 [shape = 'u8[143360]{0}', space=vmem, size = 0x23000, scoped, tag = 'input window, operand 2, single buffered']
    #allocation6 [shape = 's32[1]{0}', space=sflag, size = 0x4, scoped, tag = 'scoped memory for lnet_core.1']
    #allocation7 [shape = 'u8[8192]{0}', space=vmem, size = 0x2000, scoped, tag = 'output window, operand 0, single buffered']
    %8 = vsyncpa [#allocation3], 0
    %9 = vsyncpa [#allocation6], 0
    %10 = vsyncpa [#allocation4], 0
    // Predicated region
    $region2: #{lnet_core.1} parent=1 // pred_check
      _
    $region3: #{lnet_core.1} parent=1 // pred_check_branch
      %12 = sbr.rel (0) target = $region5
    $region4: #{lnet_core.1} parent=1 // pred_region
      %s14 = ssub.s32 64, 64
      %15 = vsyncadd [#allocation3], %s14
      %s17 = sshll.u32 [#allocation2], 4
      %s18 = int_to_ptr.vmem [resolvable:$true] %s17
      %20 = dma.hbm_to_vmem [thread:$0]  %s0, 64, %s18, [#allocation3]
    $region5: #{lnet_core.1} parent=1 // pred_fallthru
      _
    // Predicated region
    $region6: #{lnet_core.1} parent=1 // pred_check
      _
    $region7: #{lnet_core.1} parent=1 // pred_check_branch
      %22 = sbr.rel (0) target = $region9
    $region8: #{lnet_core.1} parent=1 // pred_region
      _
    $region9: #{lnet_core.1} parent=1 // pred_fallthru
      _
    // Predicated region
    $region10: #{lnet_core.1} parent=1 // pred_check
      _
    $region11: #{lnet_core.1} parent=1 // pred_check_branch
      %24 = sbr.rel (0) target = $region13
    $region12: #{lnet_core.1} parent=1 // pred_region
      %s26 = ssub.s32 4480, 4480
      %27 = vsyncadd [#allocation6], %s26
      %s28 = sshll.u32 [#allocation5], 4
      %s29 = int_to_ptr.vmem [resolvable:$true] %s28
      %34 = dma.hbm_to_vmem [thread:$0]  %s2, 4480, %s29, [#allocation6], 128, 128, 8
    $region13: #{lnet_core.1} parent=1 // pred_fallthru
      _
    // Predicated region
    $region14: #{lnet_core.1} parent=1 // pred_check
      _
    $region15: #{lnet_core.1} parent=1 // pred_check_branch
      %36 = sbr.rel (0) target = $region17
    $region16: #{lnet_core.1} parent=1 // pred_region
      %37 = dma.done [#allocation3], 64
    $region17: #{lnet_core.1} parent=1 // pred_fallthru
      _
    // Predicated region
    $region18: #{lnet_core.1} parent=1 // pred_check
      _
    $region19: #{lnet_core.1} parent=1 // pred_check_branch
      %39 = sbr.rel (0) target = $region21
    $region20: #{lnet_core.1} parent=1 // pred_region
      %40 = dma.done [#allocation6], 4480
    $region21: #{lnet_core.1} parent=1 // pred_fallthru
      _
    %v41 = vld [vmem:[#allocation5] sm:$0xff]
    %v42 = vld [vmem:[#allocation5 + $0x8] sm:$0xff]
    %v43 = vld [vmem:[#allocation5 + $0x10] sm:$0xff]
    %v44 = vld [vmem:[#allocation5 + $0x18] sm:$0xff]
    %v45 = vld [vmem:[#allocation5 + $0x20] sm:$0xff]
    %v46 = vld [vmem:[#allocation5 + $0x28] sm:$0xff]
    %v47 = vld [vmem:[#allocation5 + $0x30] sm:$0xff]
    %v48 = vld [vmem:[#allocation5 + $0x38] sm:$0xff]
    %v49 = vld [vmem:[#allocation5 + $0x40] sm:$0xff]
    %v50 = vld [vmem:[#allocation5 + $0x48] sm:$0xff]
    %v51 = vld [vmem:[#allocation5 + $0x50] sm:$0xff]
    %v52 = vld [vmem:[#allocation5 + $0x58] sm:$0xff]
    %v53 = vld [vmem:[#allocation5 + $0x60] sm:$0xff]
    %v54 = vld [vmem:[#allocation5 + $0x68] sm:$0xff]
    %v55 = vld [vmem:[#allocation5 + $0x70] sm:$0xff]
    %v56 = vld [vmem:[#allocation5 + $0x78] sm:$0xff]
    %v57 = vld [vmem:[#allocation5 + $0x80] sm:$0xff]
    %v58 = vld [vmem:[#allocation5 + $0x88] sm:$0xff]
    %v59 = vld [vmem:[#allocation5 + $0x90] sm:$0xff]
    %v60 = vld [vmem:[#allocation5 + $0x98] sm:$0xff]
    %v61 = vld [vmem:[#allocation5 + $0xa0] sm:$0xff]
    %v62 = vld [vmem:[#allocation5 + $0xa8] sm:$0xff]
    %v63 = vld [vmem:[#allocation5 + $0xb0] sm:$0xff]
    %v64 = vld [vmem:[#allocation5 + $0xb8] sm:$0xff]
    %v65 = vld [vmem:[#allocation5 + $0xc0] sm:$0xff]
    %v66 = vld [vmem:[#allocation5 + $0xc8] sm:$0xff]
    %v67 = vld [vmem:[#allocation5 + $0xd0] sm:$0xff]
    %v68 = vld [vmem:[#allocation5 + $0xd8] sm:$0xff]
    %v69 = vld [vmem:[#allocation5 + $0xe0] sm:$0xff]
    %v70 = vld [vmem:[#allocation5 + $0xe8] sm:$0xff]
    %v71 = vld [vmem:[#allocation5 + $0xf0] sm:$0xff]
    %v72 = vld [vmem:[#allocation5 + $0xf8] sm:$0xff]
    %v73 = vld [vmem:[#allocation5 + $0x100] sm:$0xff]
    %v74 = vld [vmem:[#allocation5 + $0x108] sm:$0xff]
    %v75 = vld [vmem:[#allocation5 + $0x110] sm:$0xff]
    %v76 = vld [vmem:[#allocation2] sm:$0x7]
    %v77 = vlaneseq
    %v78 = vshrl.u32 %v77, 7
    %v79 = vsub.s32 0, %v78
    %v80 = vrot.slane %v75, %v79
    %vm81 = vcmask 130048
    %v83 = vsel %vm81, %v76, 0
    %85 = vmatprep.subr.mxu0 0.0
    %86 = vmatpush1.msra.mxu0 %v41
    %87 = vmatprep.subr.mxu0 0.0
    %88 = vmatpush1.msra.mxu0 %v42
    %89 = vmatprep.subr.mxu0 0.0
    %90 = vmatpush1.msra.mxu0 0.0
    %91 = vmatprep.subr.mxu0 0.0
    %92 = vmatpush1.msra.mxu0 0.0
    %93 = vmatprep.subr.mxu0 0.0
    %94 = vmatpush1.msra.mxu0 0.0
    %95 = vmatprep.subr.mxu0 0.0
    %96 = vmatpush1.msra.mxu0 0.0
    %97 = vmatprep.subr.mxu0 0.0
    %98 = vmatpush1.msra.mxu0 0.0
    %99 = vmatprep.subr.mxu0 0.0
    %100 = vmatpush1.msra.mxu0 0.0
    %101 = vmatprep.subr.mxu0 0.0
    %102 = vmatpush1.msra.mxu0 0.0
    %103 = vmatprep.subr.mxu0 0.0
    %104 = vmatpush1.msra.mxu0 0.0
    %105 = vmatprep.subr.mxu0 0.0
    %106 = vmatpush1.msra.mxu0 0.0
    %107 = vmatprep.subr.mxu0 0.0
    %108 = vmatpush1.msra.mxu0 0.0
    %109 = vmatprep.subr.mxu0 0.0
    %110 = vmatpush1.msra.mxu0 0.0
    %111 = vmatprep.subr.mxu0 0.0
    %112 = vmatpush1.msra.mxu0 0.0
    %113 = vmatprep.subr.mxu0 0.0
    %114 = vmatpush1.msra.mxu0 0.0
    %115 = vmatprep.subr.mxu0 0.0
    %116 = vmatpush1.msra.mxu0 0.0
    %117 = vmatprep.subr.mxu0 0.0
    %118 = vmatpush1.msra.mxu0 0.0
    %119 = vmatprep.subr.mxu0 0.0
    %120 = vmatpush1.msra.mxu0 0.0
    %121 = vmatprep.subr.mxu0 0.0
    %122 = vmatpush1.msra.mxu0 0.0
    %123 = vmatprep.subr.mxu0 0.0
    %124 = vmatpush1.msra.mxu0 0.0
    %125 = vmatprep.subr.mxu0 0.0
    %126 = vmatpush1.msra.mxu0 0.0
    %127 = vmatprep.subr.mxu0 0.0
    %128 = vmatpush1.msra.mxu0 0.0
    %129 = vmatprep.subr.mxu0 0.0
    %130 = vmatpush1.msra.mxu0 0.0
    %131 = vmatprep.subr.mxu0 0.0
    %132 = vmatpush1.msra.mxu0 0.0
    %133 = vmatprep.subr.mxu0 0.0
    %134 = vmatpush1.msra.mxu0 0.0
    %135 = vmatprep.subr.mxu0 0.0
    %136 = vmatpush1.msra.mxu0 0.0
    %137 = vmatprep.subr.mxu0 0.0
    %138 = vmatpush1.msra.mxu0 0.0
    %139 = vmatprep.subr.mxu0 0.0
    %140 = vmatpush1.msra.mxu0 0.0
    %141 = vmatprep.subr.mxu0 0.0
    %142 = vmatpush1.msra.mxu0 0.0
    %143 = vmatprep.subr.mxu0 0.0
    %144 = vmatpush1.msra.mxu0 0.0
    %145 = vmatprep.subr.mxu0 0.0
    %146 = vmatpush1.msra.mxu0 0.0
    %147 = vmatprep.subr.mxu0 0.0
    %148 = vmatpush1.msra.mxu0 0.0
    %149 = vmatprep.mubr.f32.mxu0 0.0
    %150 = vmatmul.mubr.f32.gmra.mrb[0].mxu0 %v83
    %v151 = vpop.f32.mrb[0].mxu0
    %v152 = vadd.f32 %v80, %v151
    %v153 = vpop.f32.mrb[0].mxu0
    %154 = vdwg.mxu0
    %v155 = vld [vmem:[%s1] sm:$0x1]
    %156 = vmatprep.subr.mxu0 0.0
    %157 = vmatpush1.msra.mxu0 %v43
    %158 = vmatprep.subr.mxu0 0.0
    %159 = vmatpush1.msra.mxu0 %v44
    %160 = vmatprep.subr.mxu0 0.0
    %161 = vmatpush1.msra.mxu0 %v45
    %162 = vmatprep.subr.mxu0 0.0
    %163 = vmatpush1.msra.mxu0 %v46
    %164 = vmatprep.subr.mxu0 0.0
    %165 = vmatpush1.msra.mxu0 %v47
    %166 = vmatprep.subr.mxu0 0.0
    %167 = vmatpush1.msra.mxu0 %v48
    %168 = vmatprep.subr.mxu0 0.0
    %169 = vmatpush1.msra.mxu0 %v49
    %170 = vmatprep.subr.mxu0 0.0
    %171 = vmatpush1.msra.mxu0 %v50
    %172 = vmatprep.subr.mxu0 0.0
    %173 = vmatpush1.msra.mxu0 %v51
    %174 = vmatprep.subr.mxu0 0.0
    %175 = vmatpush1.msra.mxu0 %v52
    %176 = vmatprep.subr.mxu0 0.0
    %177 = vmatpush1.msra.mxu0 %v53
    %178 = vmatprep.subr.mxu0 0.0
    %179 = vmatpush1.msra.mxu0 %v54
    %180 = vmatprep.subr.mxu0 0.0
    %181 = vmatpush1.msra.mxu0 %v55
    %182 = vmatprep.subr.mxu0 0.0
    %183 = vmatpush1.msra.mxu0 %v56
    %184 = vmatprep.subr.mxu0 0.0
    %185 = vmatpush1.msra.mxu0 %v57
    %186 = vmatprep.subr.mxu0 0.0
    %187 = vmatpush1.msra.mxu0 %v58
    %188 = vmatprep.subr.mxu0 0.0
    %189 = vmatpush1.msra.mxu0 0.0
    %190 = vmatprep.subr.mxu0 0.0
    %191 = vmatpush1.msra.mxu0 0.0
    %192 = vmatprep.subr.mxu0 0.0
    %193 = vmatpush1.msra.mxu0 0.0
    %194 = vmatprep.subr.mxu0 0.0
    %195 = vmatpush1.msra.mxu0 0.0
    %196 = vmatprep.subr.mxu0 0.0
    %197 = vmatpush1.msra.mxu0 0.0
    %198 = vmatprep.subr.mxu0 0.0
    %199 = vmatpush1.msra.mxu0 0.0
    %200 = vmatprep.subr.mxu0 0.0
    %201 = vmatpush1.msra.mxu0 0.0
    %202 = vmatprep.subr.mxu0 0.0
    %203 = vmatpush1.msra.mxu0 0.0
    %204 = vmatprep.subr.mxu0 0.0
    %205 = vmatpush1.msra.mxu0 0.0
    %206 = vmatprep.subr.mxu0 0.0
    %207 = vmatpush1.msra.mxu0 0.0
    %208 = vmatprep.subr.mxu0 0.0
    %209 = vmatpush1.msra.mxu0 0.0
    %210 = vmatprep.subr.mxu0 0.0
    %211 = vmatpush1.msra.mxu0 0.0
    %212 = vmatprep.subr.mxu0 0.0
    %213 = vmatpush1.msra.mxu0 0.0
    %214 = vmatprep.subr.mxu0 0.0
    %215 = vmatpush1.msra.mxu0 0.0
    %216 = vmatprep.subr.mxu0 0.0
    %217 = vmatpush1.msra.mxu0 0.0
    %218 = vmatprep.subr.mxu0 0.0
    %219 = vmatpush1.msra.mxu0 0.0
    %220 = vmatprep.mubr.f32.mxu0 0.0
    %221 = vmatmul.mubr.f32.gmra.mrb[0].mxu0 %v155
    %v222 = vpop.f32.mrb[0].mxu0
    %v223 = vadd.f32 0.0, %v222
    %v224 = vpop.f32.mrb[0].mxu0
    %225 = vdwg.mxu0
    %v226 = vadd.f32 %v152, %v223
    %227 = vmatprep.subr.mxu0 0.0
    %228 = vmatpush1.msra.mxu0 %v43
    %229 = vmatprep.subr.mxu0 0.0
    %230 = vmatpush1.msra.mxu0 %v44
    %231 = vmatprep.subr.mxu0 0.0
    %232 = vmatpush1.msra.mxu0 %v45
    %233 = vmatprep.subr.mxu0 0.0
    %234 = vmatpush1.msra.mxu0 %v46
    %235 = vmatprep.subr.mxu0 0.0
    %236 = vmatpush1.msra.mxu0 %v47
    %237 = vmatprep.subr.mxu0 0.0
    %238 = vmatpush1.msra.mxu0 %v48
    %239 = vmatprep.subr.mxu0 0.0
    %240 = vmatpush1.msra.mxu0 %v49
    %241 = vmatprep.subr.mxu0 0.0
    %242 = vmatpush1.msra.mxu0 %v50
    %243 = vmatprep.subr.mxu0 0.0
    %244 = vmatpush1.msra.mxu0 %v51
    %245 = vmatprep.subr.mxu0 0.0
    %246 = vmatpush1.msra.mxu0 %v52
    %247 = vmatprep.subr.mxu0 0.0
    %248 = vmatpush1.msra.mxu0 %v53
    %249 = vmatprep.subr.mxu0 0.0
    %250 = vmatpush1.msra.mxu0 %v54
    %251 = vmatprep.subr.mxu0 0.0
    %252 = vmatpush1.msra.mxu0 %v55
    %253 = vmatprep.subr.mxu0 0.0
    %254 = vmatpush1.msra.mxu0 %v56
    %255 = vmatprep.subr.mxu0 0.0
    %256 = vmatpush1.msra.mxu0 %v57
    %257 = vmatprep.subr.mxu0 0.0
    %258 = vmatpush1.msra.mxu0 %v58
    %259 = vmatprep.subr.mxu0 0.0
    %260 = vmatpush1.msra.mxu0 0.0
    %261 = vmatprep.subr.mxu0 0.0
    %262 = vmatpush1.msra.mxu0 0.0
    %263 = vmatprep.subr.mxu0 0.0
    %264 = vmatpush1.msra.mxu0 0.0
    %265 = vmatprep.subr.mxu0 0.0
    %266 = vmatpush1.msra.mxu0 0.0
    %267 = vmatprep.subr.mxu0 0.0
    %268 = vmatpush1.msra.mxu0 0.0
    %269 = vmatprep.subr.mxu0 0.0
    %270 = vmatpush1.msra.mxu0 0.0
    %271 = vmatprep.subr.mxu0 0.0
    %272 = vmatpush1.msra.mxu0 0.0
    %273 = vmatprep.subr.mxu0 0.0
    %274 = vmatpush1.msra.mxu0 0.0
    %275 = vmatprep.subr.mxu0 0.0
    %276 = vmatpush1.msra.mxu0 0.0
    %277 = vmatprep.subr.mxu0 0.0
    %278 = vmatpush1.msra.mxu0 0.0
    %279 = vmatprep.subr.mxu0 0.0
    %280 = vmatpush1.msra.mxu0 0.0
    %281 = vmatprep.subr.mxu0 0.0
    %282 = vmatpush1.msra.mxu0 0.0
    %283 = vmatprep.subr.mxu0 0.0
    %284 = vmatpush1.msra.mxu0 0.0
    %285 = vmatprep.subr.mxu0 0.0
    %286 = vmatpush1.msra.mxu0 0.0
    %287 = vmatprep.subr.mxu0 0.0
    %288 = vmatpush1.msra.mxu0 0.0
    %289 = vmatprep.subr.mxu0 0.0
    %290 = vmatpush1.msra.mxu0 0.0
    %291 = vmatprep.mubr.f32.mxu0 0.0
    %292 = vmatmul.mubr.f32.gmra.mrb[0].mxu0 %v226
    %v293 = vpop.f32.mrb[0].mxu0
    %v294 = vadd.f32 0.0, %v293
    %v295 = vpop.f32.mrb[0].mxu0
    %296 = vdwg.mxu0
    %v298 = vrot.slane %v294, 7
    %v300 = vadd.f32 %v152, %v298
    %v302 = vrot.slane %v300, 1
    %304 = vmatprep.subr.mxu0 0.0
    %305 = vmatpush1.msra.mxu0 %v43
    %306 = vmatprep.subr.mxu0 0.0
    %307 = vmatpush1.msra.mxu0 %v44
    %308 = vmatprep.subr.mxu0 0.0
    %309 = vmatpush1.msra.mxu0 %v45
    %310 = vmatprep.subr.mxu0 0.0
    %311 = vmatpush1.msra.mxu0 %v46
    %312 = vmatprep.subr.mxu0 0.0
    %313 = vmatpush1.msra.mxu0 %v47
    %314 = vmatprep.subr.mxu0 0.0
    %315 = vmatpush1.msra.mxu0 %v48
    %316 = vmatprep.subr.mxu0 0.0
    %317 = vmatpush1.msra.mxu0 %v49
    %318 = vmatprep.subr.mxu0 0.0
    %319 = vmatpush1.msra.mxu0 %v50
    %320 = vmatprep.subr.mxu0 0.0
    %321 = vmatpush1.msra.mxu0 %v51
    %322 = vmatprep.subr.mxu0 0.0
    %323 = vmatpush1.msra.mxu0 %v52
    %324 = vmatprep.subr.mxu0 0.0
    %325 = vmatpush1.msra.mxu0 %v53
    %326 = vmatprep.subr.mxu0 0.0
    %327 = vmatpush1.msra.mxu0 %v54
    %328 = vmatprep.subr.mxu0 0.0
    %329 = vmatpush1.msra.mxu0 %v55
    %330 = vmatprep.subr.mxu0 0.0
    %331 = vmatpush1.msra.mxu0 %v56
    %332 = vmatprep.subr.mxu0 0.0
    %333 = vmatpush1.msra.mxu0 %v57
    %334 = vmatprep.subr.mxu0 0.0
    %335 = vmatpush1.msra.mxu0 %v58
    %336 = vmatprep.subr.mxu0 0.0
    %337 = vmatpush1.msra.mxu0 0.0
    %338 = vmatprep.subr.mxu0 0.0
    %339 = vmatpush1.msra.mxu0 0.0
    %340 = vmatprep.subr.mxu0 0.0
    %341 = vmatpush1.msra.mxu0 0.0
    %342 = vmatprep.subr.mxu0 0.0
    %343 = vmatpush1.msra.mxu0 0.0
    %344 = vmatprep.subr.mxu0 0.0
    %345 = vmatpush1.msra.mxu0 0.0
    %346 = vmatprep.subr.mxu0 0.0
    %347 = vmatpush1.msra.mxu0 0.0
    %348 = vmatprep.subr.mxu0 0.0
    %349 = vmatpush1.msra.mxu0 0.0
    %350 = vmatprep.subr.mxu0 0.0
    %351 = vmatpush1.msra.mxu0 0.0
    %352 = vmatprep.subr.mxu0 0.0
    %353 = vmatpush1.msra.mxu0 0.0
    %354 = vmatprep.subr.mxu0 0.0
    %355 = vmatpush1.msra.mxu0 0.0
    %356 = vmatprep.subr.mxu0 0.0
    %357 = vmatpush1.msra.mxu0 0.0
    %358 = vmatprep.subr.mxu0 0.0
    %359 = vmatpush1.msra.mxu0 0.0
    %360 = vmatprep.subr.mxu0 0.0
    %361 = vmatpush1.msra.mxu0 0.0
    %362 = vmatprep.subr.mxu0 0.0
    %363 = vmatpush1.msra.mxu0 0.0
    %364 = vmatprep.subr.mxu0 0.0
    %365 = vmatpush1.msra.mxu0 0.0
    %366 = vmatprep.subr.mxu0 0.0
    %367 = vmatpush1.msra.mxu0 0.0
    %368 = vmatprep.mubr.f32.mxu0 0.0
    %369 = vmatmul.mubr.f32.gmra.mrb[0].mxu0 %v302
    %v370 = vpop.f32.mrb[0].mxu0
    %v371 = vadd.f32 0.0, %v370
    %v372 = vpop.f32.mrb[0].mxu0
    %373 = vdwg.mxu0
    %v375 = vrot.slane %v371, 6
    %v377 = vadd.f32 %v152, %v375
    %vm378 = vcmask 1040384
    %v379 = vsel %vm378, %v226, %v300
    %vm380 = vcmask 1041408
    %v381 = vsel %vm380, %v379, %v377
    %v382 = vlaneseq
    %v383 = vshrl.u32 %v382, 7
    %v384 = vsub.s32 1, %v383
    %v385 = vrot.slane %v75, %v384
    %386 = vmatprep.subr.mxu0 0.0
    %387 = vmatpush1.msra.mxu0 %v59
    %388 = vmatprep.subr.mxu0 0.0
    %389 = vmatpush1.msra.mxu0 %v60
    %390 = vmatprep.subr.mxu0 0.0
    %391 = vmatpush1.msra.mxu0 %v61
    %392 = vmatprep.subr.mxu0 0.0
    %393 = vmatpush1.msra.mxu0 %v62
    %394 = vmatprep.subr.mxu0 0.0
    %395 = vmatpush1.msra.mxu0 %v63
    %396 = vmatprep.subr.mxu0 0.0
    %397 = vmatpush1.msra.mxu0 %v64
    %398 = vmatprep.subr.mxu0 0.0
    %399 = vmatpush1.msra.mxu0 %v65
    %400 = vmatprep.subr.mxu0 0.0
    %401 = vmatpush1.msra.mxu0 %v66
    %402 = vmatprep.subr.mxu0 0.0
    %403 = vmatpush1.msra.mxu0 %v67
    %404 = vmatprep.subr.mxu0 0.0
    %405 = vmatpush1.msra.mxu0 %v68
    %406 = vmatprep.subr.mxu0 0.0
    %407 = vmatpush1.msra.mxu0 %v69
    %408 = vmatprep.subr.mxu0 0.0
    %409 = vmatpush1.msra.mxu0 %v70
    %410 = vmatprep.subr.mxu0 0.0
    %411 = vmatpush1.msra.mxu0 %v71
    %412 = vmatprep.subr.mxu0 0.0
    %413 = vmatpush1.msra.mxu0 %v72
    %414 = vmatprep.subr.mxu0 0.0
    %415 = vmatpush1.msra.mxu0 %v73
    %416 = vmatprep.subr.mxu0 0.0
    %417 = vmatpush1.msra.mxu0 %v74
    %418 = vmatprep.subr.mxu0 0.0
    %419 = vmatpush1.msra.mxu0 0.0
    %420 = vmatprep.subr.mxu0 0.0
    %421 = vmatpush1.msra.mxu0 0.0
    %422 = vmatprep.subr.mxu0 0.0
    %423 = vmatpush1.msra.mxu0 0.0
    %424 = vmatprep.subr.mxu0 0.0
    %425 = vmatpush1.msra.mxu0 0.0
    %426 = vmatprep.subr.mxu0 0.0
    %427 = vmatpush1.msra.mxu0 0.0
    %428 = vmatprep.subr.mxu0 0.0
    %429 = vmatpush1.msra.mxu0 0.0
    %430 = vmatprep.subr.mxu0 0.0
    %431 = vmatpush1.msra.mxu0 0.0
    %432 = vmatprep.subr.mxu0 0.0
    %433 = vmatpush1.msra.mxu0 0.0
    %434 = vmatprep.subr.mxu0 0.0
    %435 = vmatpush1.msra.mxu0 0.0
    %436 = vmatprep.subr.mxu0 0.0
    %437 = vmatpush1.msra.mxu0 0.0
    %438 = vmatprep.subr.mxu0 0.0
    %439 = vmatpush1.msra.mxu0 0.0
    %440 = vmatprep.subr.mxu0 0.0
    %441 = vmatpush1.msra.mxu0 0.0
    %442 = vmatprep.subr.mxu0 0.0
    %443 = vmatpush1.msra.mxu0 0.0
    %444 = vmatprep.subr.mxu0 0.0
    %445 = vmatpush1.msra.mxu0 0.0
    %446 = vmatprep.subr.mxu0 0.0
    %447 = vmatpush1.msra.mxu0 0.0
    %448 = vmatprep.subr.mxu0 0.0
    %449 = vmatpush1.msra.mxu0 0.0
    %450 = vmatprep.mubr.f32.mxu0 0.0
    %451 = vmatmul.mubr.f32.gmra.mrb[0].mxu0 %v381
    %v452 = vpop.f32.mrb[0].mxu0
    %v453 = vadd.f32 %v385, %v452
    %v454 = vpop.f32.mrb[0].mxu0
    %455 = vdwg.mxu0
    %vm456 = vcmp.gt.f32.partialorder %v75, 0.5
    %v458 = vrot.slane %v453, 6
    %v460 = vsel %vm456, %v458, -10000.0
    %vm461 = vcmask 1044482
    %v462 = vsel %vm461, %v460, -inf
    %463 = vmax.xlane.f32.xlu0 %v462
    %v464 = vpop.xlane.xlu0 %463
    %v465 = vsub.f32 %v460, %v464
    %v466 = vmul.f32 %v465, 1.442695
    %v467 = vpow.pop %v466
    %v468 = vsel %vm461, %v467, 0.0
    %469 = vadd.xlane.f32.xlu0 %v468
    %v470 = vpop.xlane.xlu0 %469
    %v471 = vrcp.pop %v470
    %v472 = vmul.f32 1.0, %v471
    %v473 = vmul.f32 %v467, %v472
    %v474 = vlog2.pop %v470
    %v475 = vmul.f32 %v474, 0.6931472
    %v476 = vmul.f32 %v467, %v465
    %v477 = vsel %vm461, %v476, 0.0
    %478 = vadd.xlane.f32.xlu0 %v477
    %v479 = vpop.xlane.xlu0 %478
    %v480 = vmul.f32 %v479, %v472
    %v481 = vsub.f32 %v475, %v480
    %v483 = vrot.slane %v460, 2
    %v486 = vrot.slane %v473, 7
    %v489 = vrot.slane %v481, 4
    %v492 = vrot.slane %v377, 1
    %vm494 = vcmask 1042432
    %v495 = vsel %vm494, %v483, %v486
    %vm496 = vcmask 1045504
    %v497 = vsel %vm496, %v495, %v489
    %v498 = vsel %vm378, %v489, %v492
    %v499 = vsel %vm380, %v498, 0.0
    %500 = vst [vmem:[#allocation7] sm:$0xff] %v497
    %501 = vst [vmem:[#allocation7 + $0x8] sm:$0xff] %v499
    // Predicated region
    $region22: #{lnet_core.1} parent=1 // pred_check
      _
    $region23: #{lnet_core.1} parent=1 // pred_check_branch
      %503 = sbr.rel (0) target = $region25
    $region24: #{lnet_core.1} parent=1 // pred_region
      %s505 = ssub.s32 256, 256
      %506 = vsyncadd [#allocation4], %s505
      %s507 = sshll.u32 [#allocation7], 4
      %s508 = int_to_ptr.vmem [resolvable:$true] %s507
      %513 = dma.vmem_to_hbm [thread:$0]  %s508, 256, %s3, [#allocation4], 128, 128, 8
    $region25: #{lnet_core.1} parent=1 // pred_fallthru
      _
    // Predicated region
    $region26: #{lnet_core.1} parent=1 // pred_check
      _
    $region27: #{lnet_core.1} parent=1 // pred_check_branch
      %515 = sbr.rel (0) target = $region29
    $region28: #{lnet_core.1} parent=1 // pred_region
      %516 = dma.done [#allocation4], 256
    $region29: #{lnet_core.1} parent=1 // pred_fallthru
      _
    %517 = vsyncpa [#allocation3], 1
    %518 = vsyncpa [#allocation6], 1
    %519 = vsyncpa [#allocation4], 1

</llo_original>
